<compile_context>
chip_gen: v7x
topology: tpu7x:2x2x1
jax: 0.10.0
libtpu: 0.0.40
codegen_flags: <defaults>
</compile_context>

<pallas_src>
import functools
from typing import NamedTuple, Optional

import numpy as np
import jax
import jax.numpy as jnp
from jax.experimental import pallas as pl
from jax.experimental.pallas import tpu as pltpu

_COMPUTE_DTYPE = jnp.bfloat16


def _round_up(n: int, m: int) -> int:
    return ((n + m - 1) // m) * m


def _cdiv(a: int, b: int) -> int:
    return -(-a // b)


@functools.lru_cache(maxsize=None)
def _vmem_capacity_bytes() -> int:
    try:
        return int(pltpu.get_tpu_info().vmem_capacity_bytes)
    except Exception:
        return 128 * 1024 * 1024


def _bspec(block_shape, index_map, buffer_count=None):
    """BlockSpec helper; falls back gracefully if pipeline_mode is unsupported."""
    if buffer_count is not None:
        try:
            return pl.BlockSpec(block_shape, index_map,
                                pipeline_mode=pl.Buffered(buffer_count))
        except TypeError:
            pass
    return pl.BlockSpec(block_shape, index_map)


# ----------------------------------------------------------------------------
# Kernels
# ----------------------------------------------------------------------------
def _sae_tiled_kernel(x_ref, wet_ref, be_ref, wdt_ref, bd_ref,
                      recon_ref, code_ref, acc_ref):
    """Grid = (batch tile i [parallel], hidden tile j [arbitrary]).

    x_ref: (tm, Dp) bf16;  wet_ref: (Dp, th) bf16;  be_ref: (1, th) f32
    wdt_ref: (th, Dp) bf16; bd_ref: (1, Dp) f32
    recon_ref: (tm, Dp) out dtype (resident across j); code_ref: (tm, th)
    acc_ref: (tm, Dp) f32 decoder accumulator.
    """
    j = pl.program_id(1)

    @pl.when(j == 0)
    def _():
        acc_ref[...] = jnp.zeros_like(acc_ref)

    h = jnp.dot(x_ref[...], wet_ref[...], preferred_element_type=jnp.float32)
    code = jnp.maximum(h + be_ref[...], 0.0)
    code_ref[...] = code.astype(code_ref.dtype)

    acc_ref[...] += jnp.dot(code.astype(wdt_ref.dtype), wdt_ref[...],
                            preferred_element_type=jnp.float32)

    @pl.when(j == pl.num_programs(1) - 1)
    def _():
        recon_ref[...] = (acc_ref[...] + bd_ref[...]).astype(recon_ref.dtype)


def _sae_resident_kernel(x_ref, wet_ref, be_ref, wdt_ref, bd_ref,
                         recon_ref, code_ref):
    """Grid = (batch tile i,). Weights fully VMEM-resident, one dot per matmul."""
    h = jnp.dot(x_ref[...], wet_ref[...], preferred_element_type=jnp.float32)
    code = jnp.maximum(h + be_ref[...], 0.0)
    code_ref[...] = code.astype(code_ref.dtype)
    recon = jnp.dot(code.astype(wdt_ref.dtype), wdt_ref[...],
                    preferred_element_type=jnp.float32) + bd_ref[...]
    recon_ref[...] = recon.astype(recon_ref.dtype)


# ----------------------------------------------------------------------------
# Tile / path planning
# ----------------------------------------------------------------------------
class _Plan(NamedTuple):
    tm: int
    n_bt: int
    th: int
    resident: bool
    vmem_limit: int


def _batch_tiling(B: int, pref_tm: int):
    """Pick a batch tile that bounds padding waste; multiple of 16 (bf16 rows)."""
    b_aligned = _round_up(max(B, 1), 16)
    if b_aligned <= pref_tm:
        return b_aligned, 1
    n = _cdiv(B, pref_tm)
    tm = _round_up(_cdiv(B, n), 16)
    return tm, n


def _vmem_limit(working_set: int, capacity: int) -> int:
    return int(min(capacity * 3 // 4, max(working_set + (8 << 20), 32 << 20)))


def _select_plan(B, Dp, Hp, out_isz, code_isz,
                 batch_tile=None, hidden_tile=None, force_path=None) -> _Plan:
    cap = _vmem_capacity_bytes()
    budget = cap // 2  # working-set budget: leave headroom for compiler scratch

    if batch_tile is not None:
        pref = max(16, _round_up(batch_tile, 16))
    elif cap >= 96 * 1024 * 1024:        # v5e / v6e: 128 MiB VMEM
        pref = 1024 if Dp <= 1536 else 512
    else:                                # v7x: 64 MiB / TC
        pref = 512 if Dp <= 2048 else 256

    if hidden_tile is not None:
        th_cap = min(Hp, max(128, _round_up(hidden_tile, 128)))
    else:
        th_cap = min(Hp, 2048)

    nh = Hp // 128
    th_cands = sorted({128 * d for d in range(1, nh + 1) if nh % d == 0},
                      reverse=True)

    def resident_bytes(tm):
        return (2 * tm * Dp * 2                      # x (double-buffered bf16)
                + Dp * Hp * 2 + Hp * Dp * 2          # weights (single-buffered)
                + Hp * 4 + Dp * 4                    # biases
                + 2 * tm * Dp * out_isz              # recon out
                + 2 * tm * Hp * code_isz             # code out
                + tm * Hp * 6 + tm * Dp * 4)         # in-kernel temporaries

    def tiled_bytes(tm, th):
        return (2 * tm * Dp * 2                      # x
                + 2 * Dp * th * 2 + 2 * th * Dp * 2  # weight tiles (double-buffered)
                + 2 * th * 4 + Dp * 4                # biases
                + 2 * tm * Dp * out_isz              # recon out
                + 2 * tm * th * code_isz             # code out
                + tm * Dp * 4                        # f32 accumulator scratch
                + tm * th * 6 + tm * Dp * 4)         # temporaries

    resident_ok = (force_path != "tiled") and (hidden_tile is None)

    while True:
        tm, n_bt = _batch_tiling(B, pref)
        if resident_ok and (force_path == "resident"
                            or resident_bytes(tm) <= budget):
            return _Plan(tm, n_bt, Hp, True,
                         _vmem_limit(resident_bytes(tm), cap))
        th = next((t for t in th_cands
                   if t <= th_cap and tiled_bytes(tm, t) <= budget), None)
        if th is not None:
            return _Plan(tm, n_bt, th, False, _vmem_limit(tiled_bytes(tm, th), cap))
        if pref <= 16:
            th = 128
            return _Plan(tm, n_bt, th, False, _vmem_limit(tiled_bytes(tm, th), cap))
        pref = max(16, pref // 2)


# ----------------------------------------------------------------------------
# Parameter preparation (hoisted out of the per-call path)
# ----------------------------------------------------------------------------
def prepare_sae_params(W_enc, b_enc, W_dec, b_dec):
    """Pad + transpose + cast the SAE weights once.

    W_enc: [H, D]; b_enc: [H]; W_dec: [D, H]; b_dec: [D].
    Returns a dict with lane-dense padded bf16 W_enc^T / W_dec^T and f32 biases.
    """
    W_enc = jnp.asarray(W_enc)
    W_dec = jnp.asarray(W_dec)
    H, D = W_enc.shape
    assert W_dec.shape == (D, H), "decoder weight must be [input_dim, hidden_dim]"
    Dp = _round_up(D, 128)
    Hp = _round_up(H, 128)

    wet = jnp.zeros((Dp, Hp), _COMPUTE_DTYPE).at[:D, :H].set(
        W_enc.T.astype(_COMPUTE_DTYPE))
    wdt = jnp.zeros((Hp, Dp), _COMPUTE_DTYPE).at[:H, :D].set(
        W_dec.T.astype(_COMPUTE_DTYPE))
    be = jnp.zeros((1, Hp), jnp.float32).at[0, :H].set(
        jnp.asarray(b_enc).astype(jnp.float32))
    bd = jnp.zeros((1, Dp), jnp.float32).at[0, :D].set(
        jnp.asarray(b_dec).astype(jnp.float32))
    return {"wet": wet, "be": be, "wdt": wdt, "bd": bd,
            "input_dim": D, "hidden_dim": H}


# ----------------------------------------------------------------------------
# Forward pass
# ----------------------------------------------------------------------------
@functools.partial(
    jax.jit,
    static_argnames=("hidden_dim", "tm", "n_bt", "th", "resident",
                     "code_dtype", "vmem_limit"))
def _sae_forward_impl(x, wet, be, wdt, bd, *, hidden_dim, tm, n_bt, th,
                      resident, code_dtype, vmem_limit):
    B, D = x.shape
    Dp, Hp = wet.shape
    Bp = tm * n_bt
    out_dtype = x.dtype
    code_dt = code_dtype

    xp = jnp.zeros((Bp, Dp), _COMPUTE_DTYPE).at[:B, :D].set(
        x.astype(_COMPUTE_DTYPE))

    out_shape = (jax.ShapeDtypeStruct((Bp, Dp), out_dtype),
                 jax.ShapeDtypeStruct((Bp, Hp), code_dt))

    # Cost estimate (advisory): two matmuls, weights re-streamed per batch tile
    # in the tiled path, once in the resident path.
    flops = 4 * Bp * Dp * Hp
    weight_bytes = (Dp * Hp + Hp * Dp) * 2
    weight_reads = 1 if resident else n_bt
    bytes_accessed = (Bp * Dp * 2 + weight_reads * weight_bytes + (Hp + Dp) * 4
                      + Bp * Dp * np.dtype(out_dtype).itemsize
                      + Bp * Hp * np.dtype(code_dt).itemsize)
    cost = pl.CostEstimate(flops=int(flops), transcendentals=0,
                           bytes_accessed=int(bytes_accessed))

    if resident:
        grid_spec = pltpu.PrefetchScalarGridSpec(
            num_scalar_prefetch=0,
            grid=(n_bt,),
            in_specs=[
                _bspec((tm, Dp), lambda i: (i, 0)),                    # x tile
                _bspec((Dp, Hp), lambda i: (0, 0), buffer_count=1),    # W_enc^T
                _bspec((1, Hp), lambda i: (0, 0), buffer_count=1),     # b_enc
                _bspec((Hp, Dp), lambda i: (0, 0), buffer_count=1),    # W_dec^T
                _bspec((1, Dp), lambda i: (0, 0), buffer_count=1),     # b_dec
            ],
            out_specs=[
                _bspec((tm, Dp), lambda i: (i, 0)),                    # recon
                _bspec((tm, Hp), lambda i: (i, 0)),                    # code
            ],
        )
        kernel = _sae_resident_kernel
        dims = ("parallel",)
    else:
        grid_spec = pltpu.PrefetchScalarGridSpec(
            num_scalar_prefetch=0,
            grid=(n_bt, Hp // th),
            in_specs=[
                _bspec((tm, Dp), lambda i, j: (i, 0)),                 # x tile
                _bspec((Dp, th), lambda i, j: (0, j)),                 # W_enc^T tile
                _bspec((1, th), lambda i, j: (0, j)),                  # b_enc tile
                _bspec((th, Dp), lambda i, j: (j, 0)),                 # W_dec^T tile
                _bspec((1, Dp), lambda i, j: (0, 0), buffer_count=1),  # b_dec
            ],
            out_specs=[
                _bspec((tm, Dp), lambda i, j: (i, 0)),  # recon (resident over j)
                _bspec((tm, th), lambda i, j: (i, j)),  # code tile
            ],
            scratch_shapes=[pltpu.VMEM((tm, Dp), jnp.float32)],
        )
        kernel = _sae_tiled_kernel
        dims = ("parallel", "arbitrary")

    recon, code = pl.pallas_call(
        kernel,
        out_shape=out_shape,
        grid_spec=grid_spec,
        compiler_params=pltpu.CompilerParams(
            dimension_semantics=dims,
            vmem_limit_bytes=int(vmem_limit)),
        cost_estimate=cost,
    )(xp, wet, be, wdt, bd)

    return recon[:B, :D], code[:B, :hidden_dim]


def sae_apply(params, x, *, code_dtype=None, batch_tile=None,
              hidden_tile=None, force_path: Optional[str] = None):
    """Hot-path forward: params from prepare_sae_params, x: [B, input_dim].

    Returns (reconstructed [B, D] in x.dtype, sparse_code [B, H] in code_dtype
    or x.dtype).
    """
    x = jnp.asarray(x)
    D = params["input_dim"]
    H = params["hidden_dim"]
    assert x.ndim == 2 and x.shape[1] == D, "x must be [batch, input_dim]"
    B = x.shape[0]
    wet, be, wdt, bd = params["wet"], params["be"], params["wdt"], params["bd"]

    code_dt = np.dtype(x.dtype) if code_dtype is None else np.dtype(code_dtype)
    plan = _select_plan(B, wet.shape[0], wet.shape[1],
                        out_isz=np.dtype(x.dtype).itemsize,
                        code_isz=code_dt.itemsize,
                        batch_tile=batch_tile, hidden_tile=hidden_tile,
                        force_path=force_path)

    return _sae_forward_impl(x, wet, be, wdt, bd,
                             hidden_dim=H, tm=plan.tm, n_bt=plan.n_bt,
                             th=plan.th, resident=plan.resident,
                             code_dtype=code_dt, vmem_limit=plan.vmem_limit)


def sae_forward(x, W_enc, b_enc, W_dec, b_dec, **kwargs):
    """Convenience one-shot wrapper (prepares weights, then applies)."""
    return sae_apply(prepare_sae_params(W_enc, b_enc, W_dec, b_dec), x, **kwargs)


def init_params(key, input_dim, hidden_dim, dtype=jnp.float32):
    """Matches the module's _init_weights: kaiming_normal_(relu) encoder,
    kaiming_normal_(linear) decoder, zero biases."""
    k_enc, k_dec = jax.random.split(key)
    enc_std = (2.0 / input_dim) ** 0.5
    W_enc = enc_std * jax.random.normal(k_enc, (hidden_dim, input_dim), dtype)
    b_enc = jnp.zeros((hidden_dim,), dtype)
    dec_std = (1.0 / hidden_dim) ** 0.5
    W_dec = dec_std * jax.random.normal(k_dec, (input_dim, hidden_dim), dtype)
    b_dec = jnp.zeros((input_dim,), dtype)
    return W_enc, b_enc, W_dec, b_dec


if __name__ == "__main__":
    key = jax.random.PRNGKey(0)
    k_p1, k_x1, k_p2, k_x2 = jax.random.split(key, 4)

    # ---- Test 1: default path (weights-resident fast path) -----------------
    D1, H1, B1 = 32, 64, 16
    W_enc, b_enc, W_dec, b_dec = init_params(k_p1, D1, H1)
    x = jax.random.normal(k_x1, (B1, D1), jnp.float32)

    params = prepare_sae_params(W_enc, b_enc, W_dec, b_dec)   # hoisted, one-time
    recon, code = sae_apply(params, x)
    jax.block_until_ready((recon, code))
    assert recon.shape == (B1, D1) and code.shape == (B1, H1)

    # Reference with matching math (bf16 matmul inputs, f32 accumulation).
    code_ref = jnp.maximum(
        jnp.dot(x.astype(jnp.bfloat16), W_enc.T.astype(jnp.bfloat16),
                preferred_element_type=jnp.float32) + b_enc, 0.0)
    recon_ref = jnp.dot(code_ref.astype(jnp.bfloat16), W_dec.T.astype(jnp.bfloat16),
                        preferred_element_type=jnp.float32) + b_dec
    assert jnp.allclose(code, code_ref, atol=2e-3, rtol=2e-3)
    assert jnp.allclose(recon, recon_ref, atol=2e-3, rtol=2e-3)

    # Pure-f32 reference (loose tolerance for bf16 MXU inputs).
    code_f32 = jnp.maximum(x @ W_enc.T + b_enc, 0.0)
    recon_f32 = code_f32 @ W_dec.T + b_dec
    assert jnp.allclose(code, code_f32, atol=5e-2, rtol=5e-2)
    assert jnp.allclose(recon, recon_f32, atol=5e-2, rtol=5e-2)

    # ---- Test 2: forced tiled path, multi batch/hidden tiles, bf16 code ----
    D2, H2, B2 = 32, 256, 48
    W_enc2, b_enc2, W_dec2, b_dec2 = init_params(k_p2, D2, H2)
    x2 = jax.random.normal(k_x2, (B2, D2), jnp.float32)
    params2 = prepare_sae_params(W_enc2, b_enc2, W_dec2, b_dec2)
    recon2, code2 = sae_apply(params2, x2, force_path="tiled",
                              batch_tile=32, hidden_tile=128,
                              code_dtype=jnp.bfloat16)
    jax.block_until_ready((recon2, code2))
    assert recon2.shape == (B2, D2) and code2.shape == (B2, H2)
    assert code2.dtype == jnp.bfloat16

    code2_ref = jnp.maximum(
        jnp.dot(x2.astype(jnp.bfloat16), W_enc2.T.astype(jnp.bfloat16),
                preferred_element_type=jnp.float32) + b_enc2, 0.0)
    recon2_ref = jnp.dot(code2_ref.astype(jnp.bfloat16),
                         W_dec2.T.astype(jnp.bfloat16),
                         preferred_element_type=jnp.float32) + b_dec2
    assert jnp.allclose(code2.astype(jnp.float32), code2_ref, atol=2e-2, rtol=2e-2)
    assert jnp.allclose(recon2, recon2_ref, atol=2e-2, rtol=2e-2)

    print("KERNEL_OK")
</pallas_src>

<mosaic_0001>
module attributes {stable_mosaic.version = 11 : i64} {
  func.func @_sae_resident_kernel(%arg0: i32, %arg1: memref<16x128xbf16, #tpu.memory_space<vmem>>, %arg2: memref<128x128xbf16, #tpu.memory_space<vmem>>, %arg3: memref<1x128xf32, #tpu.memory_space<vmem>>, %arg4: memref<128x128xbf16, #tpu.memory_space<vmem>>, %arg5: memref<1x128xf32, #tpu.memory_space<vmem>>, %arg6: memref<16x128xf32, #tpu.memory_space<vmem>>, %arg7: memref<16x128xf32, #tpu.memory_space<vmem>>) attributes {dimension_semantics = [#tpu.dimension_semantics<parallel>], iteration_bounds = array<i64: 1>, scalar_prefetch = 0 : i64, scratch_operands = 0 : i64, tpu.core_type = #tpu.core_type<tc>, window_params = [{transform_indices = @transform_0, window_bounds = array<i64: 16, 128>}, {pipeline_mode = #tpu.pipeline_mode<synchronous>, transform_indices = @transform_1, window_bounds = array<i64: 128, 128>}, {pipeline_mode = #tpu.pipeline_mode<synchronous>, transform_indices = @transform_2, window_bounds = array<i64: 1, 128>}, {pipeline_mode = #tpu.pipeline_mode<synchronous>, transform_indices = @transform_3, window_bounds = array<i64: 128, 128>}, {pipeline_mode = #tpu.pipeline_mode<synchronous>, transform_indices = @transform_4, window_bounds = array<i64: 1, 128>}, {transform_indices = @transform_5, window_bounds = array<i64: 16, 128>}, {transform_indices = @transform_6, window_bounds = array<i64: 16, 128>}]} {
    %c0 = arith.constant 0 : index
    %c0_0 = arith.constant 0 : index
    %0 = vector.load %arg1[%c0, %c0_0] : memref<16x128xbf16, #tpu.memory_space<vmem>>, vector<16x128xbf16>
    %c0_1 = arith.constant 0 : index
    %c0_2 = arith.constant 0 : index
    %1 = vector.load %arg2[%c0_1, %c0_2] : memref<128x128xbf16, #tpu.memory_space<vmem>>, vector<128x128xbf16>
    %cst = arith.constant dense<0.000000e+00> : vector<16x128xf32>
    %2 = tpu.matmul %0, %1, %cst {dimension_numbers = #tpu.dot_dimension_numbers<[1], [0], [0], [1], [0, 0, 1, 1], [], []>} : vector<16x128xbf16>, vector<128x128xbf16>, vector<16x128xf32> -> vector<16x128xf32>
    %c0_3 = arith.constant 0 : index
    %c0_4 = arith.constant 0 : index
    %3 = vector.load %arg3[%c0_3, %c0_4] : memref<1x128xf32, #tpu.memory_space<vmem>>, vector<1x128xf32>
    %4 = vector.broadcast %3 : vector<1x128xf32> to vector<16x128xf32>
    %5 = arith.addf %2, %4 : vector<16x128xf32>
    %cst_5 = arith.constant 0.000000e+00 : f32
    %6 = vector.broadcast %cst_5 : f32 to vector<16x128xf32>
    %7 = arith.maximumf %5, %6 : vector<16x128xf32>
    %c0_6 = arith.constant 0 : index
    %c0_7 = arith.constant 0 : index
    %8 = vector.load %arg7[%c0_6, %c0_7] : memref<16x128xf32, #tpu.memory_space<vmem>>, vector<16x128xf32>
    tpu.vector_store %arg7[%c0_6, %c0_7], %7 {strides = array<i32>} : memref<16x128xf32, #tpu.memory_space<vmem>>, vector<16x128xf32>,
    %9 = arith.truncf %7 : vector<16x128xf32> to vector<16x128xbf16>
    %c0_8 = arith.constant 0 : index
    %c0_9 = arith.constant 0 : index
    %10 = vector.load %arg4[%c0_8, %c0_9] : memref<128x128xbf16, #tpu.memory_space<vmem>>, vector<128x128xbf16>
    %cst_10 = arith.constant dense<0.000000e+00> : vector<16x128xf32>
    %11 = tpu.matmul %9, %10, %cst_10 {dimension_numbers = #tpu.dot_dimension_numbers<[1], [0], [0], [1], [0, 0, 1, 1], [], []>} : vector<16x128xbf16>, vector<128x128xbf16>, vector<16x128xf32> -> vector<16x128xf32>
    %c0_11 = arith.constant 0 : index
    %c0_12 = arith.constant 0 : index
    %12 = vector.load %arg5[%c0_11, %c0_12] : memref<1x128xf32, #tpu.memory_space<vmem>>, vector<1x128xf32>
    %13 = vector.broadcast %12 : vector<1x128xf32> to vector<16x128xf32>
    %14 = arith.addf %11, %13 : vector<16x128xf32>
    %c0_13 = arith.constant 0 : index
    %c0_14 = arith.constant 0 : index
    %15 = vector.load %arg6[%c0_13, %c0_14] : memref<16x128xf32, #tpu.memory_space<vmem>>, vector<16x128xf32>
    tpu.vector_store %arg6[%c0_13, %c0_14], %14 {strides = array<i32>} : memref<16x128xf32, #tpu.memory_space<vmem>>, vector<16x128xf32>,
    return
  }
  func.func @transform_0(%arg0: i32) -> (i32, i32) {
    %c0_i32 = arith.constant 0 : i32
    %c0_i32_0 = arith.constant 0 : i32
    return %arg0, %c0_i32 : i32, i32
  }
  func.func @transform_1(%arg0: i32) -> (i32, i32) {
    %c0_i32 = arith.constant 0 : i32
    %c0_i32_0 = arith.constant 0 : i32
    %c0_i32_1 = arith.constant 0 : i32
    return %c0_i32, %c0_i32_0 : i32, i32
  }
  func.func @transform_2(%arg0: i32) -> (i32, i32) {
    %c0_i32 = arith.constant 0 : i32
    %c0_i32_0 = arith.constant 0 : i32
    %c0_i32_1 = arith.constant 0 : i32
    return %c0_i32, %c0_i32_0 : i32, i32
  }
  func.func @transform_3(%arg0: i32) -> (i32, i32) {
    %c0_i32 = arith.constant 0 : i32
    %c0_i32_0 = arith.constant 0 : i32
    %c0_i32_1 = arith.constant 0 : i32
    return %c0_i32, %c0_i32_0 : i32, i32
  }
  func.func @transform_4(%arg0: i32) -> (i32, i32) {
    %c0_i32 = arith.constant 0 : i32
    %c0_i32_0 = arith.constant 0 : i32
    %c0_i32_1 = arith.constant 0 : i32
    return %c0_i32, %c0_i32_0 : i32, i32
  }
  func.func @transform_5(%arg0: i32) -> (i32, i32) {
    %c0_i32 = arith.constant 0 : i32
    %c0_i32_0 = arith.constant 0 : i32
    return %arg0, %c0_i32 : i32, i32
  }
  func.func @transform_6(%arg0: i32) -> (i32, i32) {
    %c0_i32 = arith.constant 0 : i32
    %c0_i32_0 = arith.constant 0 : i32
    return %arg0, %c0_i32 : i32, i32
  }
}

</mosaic_0001>

<llo_original>
// kernel: _sae_forward_impl.1
$region0: #{_sae_forward_impl.1}
  #allocation0 [shape = 'u32[]', space=smem, size = 0x4, offset = 0x4, fixed_abs, tag = 'smem constant byte address 0x4 - core index']
  #allocation1 [shape = 'u32[144,128]{1,0:T(1,128)}', space=vmem, size = 0x12000, scoped, tag = 'internal scratch']
  %s0 = inlined_call_operand.vmem [shape: bf16[16,128], index: 0, kind: input, shape index: {}]
  %s1 = inlined_call_operand.hbm [shape: bf16[128,128], index: 1, kind: input, shape index: {}]
  %s2 = inlined_call_operand.vmem [shape: f32[1,128], index: 2, kind: input, shape index: {}]
  %s3 = inlined_call_operand.hbm [shape: bf16[128,128], index: 3, kind: input, shape index: {}]
  %s4 = inlined_call_operand.vmem [shape: f32[1,128], index: 4, kind: input, shape index: {}]
  %s5 = inlined_call_operand.hbm [shape: f32[16,128], index: 5, kind: output, shape index: {0}]
  %s6 = inlined_call_operand.hbm [shape: f32[16,128], index: 6, kind: output, shape index: {1}]
  %7 = xla_tuple %s5, %s6
  %s8 = sld [smem:[#allocation0]]
  $region46: #{_sae_forward_impl.1} parent=0
    _
  %s10 = ssub.s32 1, %s8
  %s11 = scalar_select 0, %s10, %s8
  $region1: #{_sae_forward_impl.1} parent=0
    #allocation2 [shape = 'u8[32768]{0}', space=vmem, size = 0x8000, scoped, tag = 'input window, operand 1, single buffered']
    #allocation3 [shape = 's32[1]{0}', space=sflag, size = 0x4, scoped, tag = 'scoped memory for _sae_forward_impl.1']
    #allocation4 [shape = 's32[1]{0}', space=sflag, size = 0x4, scoped, tag = 'scoped memory for _sae_forward_impl.1']
    #allocation5 [shape = 'u8[32768]{0}', space=vmem, size = 0x8000, scoped, tag = 'input window, operand 3, single buffered']
    #allocation6 [shape = 's32[1]{0}', space=sflag, size = 0x4, scoped, tag = 'scoped memory for _sae_forward_impl.1']
    #allocation7 [shape = 'u8[8192]{0}', space=vmem, size = 0x2000, scoped, tag = 'output window, operand 0, single buffered']
    #allocation8 [shape = 'u8[8192]{0}', space=vmem, size = 0x2000, scoped, tag = 'output window, operand 1, single buffered']
    #allocation9 [shape = 's32[1]{0}', space=sflag, size = 0x4, scoped, tag = 'scoped memory for _sae_forward_impl.1']
    %12 = vsyncpa [#allocation3], 0
    %13 = vsyncpa [#allocation6], 0
    %14 = vsyncpa [#allocation4], 0
    %15 = vsyncpa [#allocation9], 0
    // Predicated region
    $region2: #{_sae_forward_impl.1} parent=1 // pred_check
      _
    $region3: #{_sae_forward_impl.1} parent=1 // pred_check_branch
      %17 = sbr.rel (0) target = $region5
    $region4: #{_sae_forward_impl.1} parent=1 // pred_region
      _
    $region5: #{_sae_forward_impl.1} parent=1 // pred_fallthru
      _
    // Predicated region
    $region6: #{_sae_forward_impl.1} parent=1 // pred_check
      _
    $region7: #{_sae_forward_impl.1} parent=1 // pred_check_branch
      %19 = sbr.rel (0) target = $region9
    $region8: #{_sae_forward_impl.1} parent=1 // pred_region
      %s21 = ssub.s32 1024, 1024
      %22 = vsyncadd [#allocation3], %s21
      %s23 = sshll.u32 [#allocation2], 4
      %s24 = int_to_ptr.vmem [resolvable:$true] %s23
      %29 = dma.hbm_to_vmem [thread:$0]  %s1, 1024, %s24, [#allocation3], 64, 64, 4
    $region9: #{_sae_forward_impl.1} parent=1 // pred_fallthru
      _
    // Predicated region
    $region10: #{_sae_forward_impl.1} parent=1 // pred_check
      _
    $region11: #{_sae_forward_impl.1} parent=1 // pred_check_branch
      %31 = sbr.rel (0) target = $region13
    $region12: #{_sae_forward_impl.1} parent=1 // pred_region
      _
    $region13: #{_sae_forward_impl.1} parent=1 // pred_fallthru
      _
    // Predicated region
    $region14: #{_sae_forward_impl.1} parent=1 // pred_check
      _
    $region15: #{_sae_forward_impl.1} parent=1 // pred_check_branch
      %33 = sbr.rel (0) target = $region17
    $region16: #{_sae_forward_impl.1} parent=1 // pred_region
      %s35 = ssub.s32 1024, 1024
      %36 = vsyncadd [#allocation6], %s35
      %s37 = sshll.u32 [#allocation5], 4
      %s38 = int_to_ptr.vmem [resolvable:$true] %s37
      %43 = dma.hbm_to_vmem [thread:$0]  %s3, 1024, %s38, [#allocation6], 64, 64, 4
    $region17: #{_sae_forward_impl.1} parent=1 // pred_fallthru
      _
    // Predicated region
    $region18: #{_sae_forward_impl.1} parent=1 // pred_check
      _
    $region19: #{_sae_forward_impl.1} parent=1 // pred_check_branch
      %45 = sbr.rel (0) target = $region21
    $region20: #{_sae_forward_impl.1} parent=1 // pred_region
      _
    $region21: #{_sae_forward_impl.1} parent=1 // pred_fallthru
      _
    // Predicated region
    $region22: #{_sae_forward_impl.1} parent=1 // pred_check
      _
    $region23: #{_sae_forward_impl.1} parent=1 // pred_check_branch
      %47 = sbr.rel (0) target = $region25
    $region24: #{_sae_forward_impl.1} parent=1 // pred_region
      %48 = dma.done [#allocation3], 1024
    $region25: #{_sae_forward_impl.1} parent=1 // pred_fallthru
      _
    // Predicated region
    $region26: #{_sae_forward_impl.1} parent=1 // pred_check
      _
    $region27: #{_sae_forward_impl.1} parent=1 // pred_check_branch
      %50 = sbr.rel (0) target = $region29
    $region28: #{_sae_forward_impl.1} parent=1 // pred_region
      %51 = dma.done [#allocation6], 1024
    $region29: #{_sae_forward_impl.1} parent=1 // pred_fallthru
      _
    %v53 = vld [vmem:[%s0] sm:$0xf]
    %v54 = vld [vmem:[%s0 + $0x4] sm:$0xf]
    %v55 = vld [vmem:[#allocation2] sm:$0xf]
    %v56 = vld [vmem:[#allocation2 + $0x4] sm:$0xf]
    %v57 = vld [vmem:[#allocation2 + $0x8] sm:$0xf]
    %v58 = vld [vmem:[#allocation2 + $0xc] sm:$0xf]
    %v59 = vld [vmem:[#allocation2 + $0x10] sm:$0xf]
    %v60 = vld [vmem:[#allocation2 + $0x14] sm:$0xf]
    %v61 = vld [vmem:[#allocation2 + $0x18] sm:$0xf]
    %v62 = vld [vmem:[#allocation2 + $0x1c] sm:$0xf]
    %v63 = vld [vmem:[#allocation2 + $0x20] sm:$0xf]
    %v64 = vld [vmem:[#allocation2 + $0x24] sm:$0xf]
    %v65 = vld [vmem:[#allocation2 + $0x28] sm:$0xf]
    %v66 = vld [vmem:[#allocation2 + $0x2c] sm:$0xf]
    %v67 = vld [vmem:[#allocation2 + $0x30] sm:$0xf]
    %v68 = vld [vmem:[#allocation2 + $0x34] sm:$0xf]
    %v69 = vld [vmem:[#allocation2 + $0x38] sm:$0xf]
    %v70 = vld [vmem:[#allocation2 + $0x3c] sm:$0xf]
    %v71 = vld [vmem:[%s2] sm:$0x1]
    %v73 = vlaneseq
    %v74 = vshrl.u32 %v73, 7
    %v75 = vsub.s32 0, %v74
    %v76 = vrot.slane %v71, %v75
    %v80 = vunpack.c.l.b16 %v53
    %v81 = vunpack.c.l.b16 %v54
    %v82 = vpack.c.b16 %v81, %v80
    %v100 = vunpack.c.l.b16 %v55
    %v101 = vunpack.c.l.b16 %v56
    %v102 = vunpack.c.l.b16 %v57
    %v103 = vunpack.c.l.b16 %v58
    %v104 = vunpack.c.l.b16 %v59
    %v105 = vunpack.c.l.b16 %v60
    %v106 = vunpack.c.l.b16 %v61
    %v107 = vunpack.c.l.b16 %v62
    %v108 = vunpack.c.l.b16 %v63
    %v109 = vunpack.c.l.b16 %v64
    %v110 = vunpack.c.l.b16 %v65
    %v111 = vunpack.c.l.b16 %v66
    %v112 = vunpack.c.l.b16 %v67
    %v113 = vunpack.c.l.b16 %v68
    %v114 = vunpack.c.l.b16 %v69
    %v115 = vunpack.c.l.b16 %v70
    %v116 = vpack.c.b16 %v101, %v100
    %v117 = vpack.c.b16 %v103, %v102
    %v118 = vpack.c.b16 %v105, %v104
    %v119 = vpack.c.b16 %v107, %v106
    %v120 = vpack.c.b16 %v109, %v108
    %v121 = vpack.c.b16 %v111, %v110
    %v122 = vpack.c.b16 %v113, %v112
    %v123 = vpack.c.b16 %v115, %v114
    %132 = vmatprep.subr.bf16.mxu0 0
    %133 = vmatpush1.bf16.msra.mxu0 %v116
    %134 = vmatprep.subr.bf16.mxu0 0
    %135 = vmatpush1.bf16.msra.mxu0 %v117
    %136 = vmatprep.subr.bf16.mxu0 0
    %137 = vmatpush1.bf16.msra.mxu0 %v118
    %138 = vmatprep.subr.bf16.mxu0 0
    %139 = vmatpush1.bf16.msra.mxu0 %v119
    %140 = vmatprep.subr.bf16.mxu0 0
    %141 = vmatpush1.bf16.msra.mxu0 %v120
    %142 = vmatprep.subr.bf16.mxu0 0
    %143 = vmatpush1.bf16.msra.mxu0 %v121
    %144 = vmatprep.subr.bf16.mxu0 0
    %145 = vmatpush1.bf16.msra.mxu0 %v122
    %146 = vmatprep.subr.bf16.mxu0 0
    %147 = vmatpush1.bf16.msra.mxu0 %v123
    %148 = vmatprep.subr.bf16.mxu0 0
    %149 = vmatpush1.bf16.msra.mxu0 0
    %150 = vmatprep.subr.bf16.mxu0 0
    %151 = vmatpush1.bf16.msra.mxu0 0
    %152 = vmatprep.subr.bf16.mxu0 0
    %153 = vmatpush1.bf16.msra.mxu0 0
    %154 = vmatprep.subr.bf16.mxu0 0
    %155 = vmatpush1.bf16.msra.mxu0 0
    %156 = vmatprep.subr.bf16.mxu0 0
    %157 = vmatpush1.bf16.msra.mxu0 0
    %158 = vmatprep.subr.bf16.mxu0 0
    %159 = vmatpush1.bf16.msra.mxu0 0
    %160 = vmatprep.subr.bf16.mxu0 0
    %161 = vmatpush1.bf16.msra.mxu0 0
    %162 = vmatprep.subr.bf16.mxu0 0
    %163 = vmatpush1.bf16.msra.mxu0 0
    %164 = vmatprep.mubr.bf16.mxu0 0
    %165 = vmatmul.mubr.bf16.gmra.mrb[0].mxu0 %v82
    %v166 = vpop.f32.mrb[0].mxu0
    %v167 = vadd.f32 %v76, %v166
    %v168 = vpop.f32.mrb[0].mxu0
    %v169 = vpop.f32.mrb[0].mxu0
    %v170 = vadd.f32 %v76, %v169
    %v171 = vpop.f32.mrb[0].mxu0
    %172 = vdwg.mxu0
    %v173 = vmax.f32 %v167, 0.0
    %v174 = vmax.f32 %v170, 0.0
    %175 = vst [vmem:[#allocation8] sm:$0xff] %v173
    %176 = vst [vmem:[#allocation8 + $0x8] sm:$0xff] %v174
    %v177 = vpack.c.bf16 %v174, %v173
    %v178 = vld [vmem:[#allocation5] sm:$0xf]
    %v179 = vld [vmem:[#allocation5 + $0x4] sm:$0xf]
    %v180 = vld [vmem:[#allocation5 + $0x8] sm:$0xf]
    %v181 = vld [vmem:[#allocation5 + $0xc] sm:$0xf]
    %v182 = vld [vmem:[#allocation5 + $0x10] sm:$0xf]
    %v183 = vld [vmem:[#allocation5 + $0x14] sm:$0xf]
    %v184 = vld [vmem:[#allocation5 + $0x18] sm:$0xf]
    %v185 = vld [vmem:[#allocation5 + $0x1c] sm:$0xf]
    %v186 = vld [vmem:[#allocation5 + $0x20] sm:$0xf]
    %v187 = vld [vmem:[#allocation5 + $0x24] sm:$0xf]
    %v188 = vld [vmem:[#allocation5 + $0x28] sm:$0xf]
    %v189 = vld [vmem:[#allocation5 + $0x2c] sm:$0xf]
    %v190 = vld [vmem:[#allocation5 + $0x30] sm:$0xf]
    %v191 = vld [vmem:[#allocation5 + $0x34] sm:$0xf]
    %v192 = vld [vmem:[#allocation5 + $0x38] sm:$0xf]
    %v193 = vld [vmem:[#allocation5 + $0x3c] sm:$0xf]
    %v194 = vld [vmem:[%s4] sm:$0x1]
    %v196 = vlaneseq
    %v197 = vshrl.u32 %v196, 7
    %v198 = vsub.s32 0, %v197
    %v199 = vrot.slane %v194, %v198
    %v217 = vunpack.c.l.b16 %v178
    %v218 = vunpack.c.l.b16 %v179
    %v219 = vunpack.c.l.b16 %v180
    %v220 = vunpack.c.l.b16 %v181
    %v221 = vunpack.c.l.b16 %v182
    %v222 = vunpack.c.l.b16 %v183
    %v223 = vunpack.c.l.b16 %v184
    %v224 = vunpack.c.l.b16 %v185
    %v225 = vunpack.c.l.b16 %v186
    %v226 = vunpack.c.l.b16 %v187
    %v227 = vunpack.c.l.b16 %v188
    %v228 = vunpack.c.l.b16 %v189
    %v229 = vunpack.c.l.b16 %v190
    %v230 = vunpack.c.l.b16 %v191
    %v231 = vunpack.c.l.b16 %v192
    %v232 = vunpack.c.l.b16 %v193
    %v233 = vpack.c.b16 %v218, %v217
    %v234 = vpack.c.b16 %v220, %v219
    %v235 = vpack.c.b16 %v222, %v221
    %v236 = vpack.c.b16 %v224, %v223
    %v237 = vpack.c.b16 %v226, %v225
    %v238 = vpack.c.b16 %v228, %v227
    %v239 = vpack.c.b16 %v230, %v229
    %v240 = vpack.c.b16 %v232, %v231
    %249 = vmatprep.subr.bf16.mxu0 0
    %250 = vmatpush1.bf16.msra.mxu0 %v233
    %251 = vmatprep.subr.bf16.mxu0 0
    %252 = vmatpush1.bf16.msra.mxu0 %v234
    %253 = vmatprep.subr.bf16.mxu0 0
    %254 = vmatpush1.bf16.msra.mxu0 %v235
    %255 = vmatprep.subr.bf16.mxu0 0
    %256 = vmatpush1.bf16.msra.mxu0 %v236
    %257 = vmatprep.subr.bf16.mxu0 0
    %258 = vmatpush1.bf16.msra.mxu0 %v237
    %259 = vmatprep.subr.bf16.mxu0 0
    %260 = vmatpush1.bf16.msra.mxu0 %v238
    %261 = vmatprep.subr.bf16.mxu0 0
    %262 = vmatpush1.bf16.msra.mxu0 %v239
    %263 = vmatprep.subr.bf16.mxu0 0
    %264 = vmatpush1.bf16.msra.mxu0 %v240
    %265 = vmatprep.subr.bf16.mxu0 0
    %266 = vmatpush1.bf16.msra.mxu0 0
    %267 = vmatprep.subr.bf16.mxu0 0
    %268 = vmatpush1.bf16.msra.mxu0 0
    %269 = vmatprep.subr.bf16.mxu0 0
    %270 = vmatpush1.bf16.msra.mxu0 0
    %271 = vmatprep.subr.bf16.mxu0 0
    %272 = vmatpush1.bf16.msra.mxu0 0
    %273 = vmatprep.subr.bf16.mxu0 0
    %274 = vmatpush1.bf16.msra.mxu0 0
    %275 = vmatprep.subr.bf16.mxu0 0
    %276 = vmatpush1.bf16.msra.mxu0 0
    %277 = vmatprep.subr.bf16.mxu0 0
    %278 = vmatpush1.bf16.msra.mxu0 0
    %279 = vmatprep.subr.bf16.mxu0 0
    %280 = vmatpush1.bf16.msra.mxu0 0
    %281 = vmatprep.mubr.bf16.mxu0 0
    %282 = vmatmul.mubr.bf16.gmra.mrb[0].mxu0 %v177
    %v283 = vpop.f32.mrb[0].mxu0
    %v284 = vadd.f32 %v199, %v283
    %v285 = vpop.f32.mrb[0].mxu0
    %v286 = vpop.f32.mrb[0].mxu0
    %v287 = vadd.f32 %v199, %v286
    %v288 = vpop.f32.mrb[0].mxu0
    %289 = vdwg.mxu0
    %290 = vst [vmem:[#allocation7] sm:$0xff] %v284
    %291 = vst [vmem:[#allocation7 + $0x8] sm:$0xff] %v287
    // Predicated region
    $region30: #{_sae_forward_impl.1} parent=1 // pred_check
      _
    $region31: #{_sae_forward_impl.1} parent=1 // pred_check_branch
      %293 = sbr.rel (0) target = $region33
    $region32: #{_sae_forward_impl.1} parent=1 // pred_region
      %s295 = ssub.s32 256, 256
      %296 = vsyncadd [#allocation4], %s295
      %s297 = sshll.u32 [#allocation7], 4
      %s298 = int_to_ptr.vmem [resolvable:$true] %s297
      %303 = dma.vmem_to_hbm [thread:$0]  %s298, 256, %s5, [#allocation4], 128, 128, 8
    $region33: #{_sae_forward_impl.1} parent=1 // pred_fallthru
      _
    // Predicated region
    $region34: #{_sae_forward_impl.1} parent=1 // pred_check
      _
    $region35: #{_sae_forward_impl.1} parent=1 // pred_check_branch
      %305 = sbr.rel (0) target = $region37
    $region36: #{_sae_forward_impl.1} parent=1 // pred_region
      %s307 = ssub.s32 256, 256
      %308 = vsyncadd [#allocation9], %s307
      %s309 = sshll.u32 [#allocation8], 4
      %s310 = int_to_ptr.vmem [resolvable:$true] %s309
      %315 = dma.vmem_to_hbm [thread:$0]  %s310, 256, %s6, [#allocation9], 128, 128, 8
    $region37: #{_sae_forward_impl.1} parent=1 // pred_fallthru
      _
    // Predicated region
    $region38: #{_sae_forward_impl.1} parent=1 // pred_check
      _
    $region39: #{_sae_forward_impl.1} parent=1 // pred_check_branch
      %317 = sbr.rel (0) target = $region41
    $region40: #{_sae_forward_impl.1} parent=1 // pred_region
      %318 = dma.done [#allocation4], 256
    $region41: #{_sae_forward_impl.1} parent=1 // pred_fallthru
      _
    // Predicated region
    $region42: #{_sae_forward_impl.1} parent=1 // pred_check
      _
    $region43: #{_sae_forward_impl.1} parent=1 // pred_check_branch
      %320 = sbr.rel (0) target = $region45
    $region44: #{_sae_forward_impl.1} parent=1 // pred_region
      %321 = dma.done [#allocation9], 256
    $region45: #{_sae_forward_impl.1} parent=1 // pred_fallthru
      _
    %322 = vsyncpa [#allocation3], 1
    %323 = vsyncpa [#allocation6], 1
    %324 = vsyncpa [#allocation4], 1
    %325 = vsyncpa [#allocation9], 1

</llo_original>
